<compile_context>
chip_gen: v5e
topology: v5e:2x2
jax: 0.10.0
libtpu: 0.0.40
codegen_flags: <defaults>
</compile_context>

<pallas_src>
import functools

import jax
import jax.numpy as jnp
from jax.experimental import pallas as pl
from jax.experimental.pallas import tpu as pltpu


def _self_attention_kernel(x_ref, wqkv_ref, bqkv_ref, o_ref, *, seq_len):
    rows, d = x_ref.shape                    # rows = (batches this step) * N
    n_batch = rows // seq_len
    dm = wqkv_ref.shape[0] // 3              # model dim D

    x2 = x_ref[...]                          # (rows, D), lane-dim = D (full)

    # Fused projection for all batch rows at once, transposed:
    #   qkv^T = Wqkv @ x^T + b   (nn.Linear: q = x @ Wq^T + bq)
    # expressed as a contract-last/last dot so no explicit transpose of x is
    # emitted here; bf16 operands, f32 accumulation, bias added in f32.
    qkvT = jax.lax.dot_general(
        wqkv_ref[...].astype(jnp.bfloat16), x2.astype(jnp.bfloat16),
        dimension_numbers=(((1,), (1,)), ((), ())),
        preferred_element_type=jnp.float32) + bqkv_ref[...]      # (3D, rows)

    # Static unrolled loop over the batch elements handled by this grid step.
    for b in range(n_batch):
        lo = b * seq_len
        # Sublane-aligned (multiples of 8) and lane-aligned (multiples of 128)
        # static slices: free.
        qT = qkvT[0 * dm:1 * dm, lo:lo + seq_len]                # (D, N)
        kT = qkvT[1 * dm:2 * dm, lo:lo + seq_len]                # (D, N)
        vT = qkvT[2 * dm:3 * dm, lo:lo + seq_len]                # (D, N)

        # scores[i, j] = q_i . k_j.  One tiny (D, N)->(N, D) transpose of q
        # (XLU slot is idle); kT feeds the MXU directly (NN form).
        q = qT.T                                                  # (N, D)
        scores = jax.lax.dot_general(
            q.astype(jnp.bfloat16), kT.astype(jnp.bfloat16),
            dimension_numbers=(((1,), (0,)), ((), ())),
            preferred_element_type=jnp.float32)                   # (N, N)

        # Element-wise ** (1/10), exactly as the PyTorch module (NOT 1/sqrt d).
        # Strictly positive scores here, so exp(0.1*log(s)) is well-defined.
        p = jnp.exp(0.1 * jnp.log(scores))

        # Softmax along the lane axis.  No max-subtraction: p <= ~1.4 so
        # exp(p) <= ~4 cannot overflow; denominator reciprocal on the EUP.
        e = jnp.exp(p)
        attn = e * pl.reciprocal(jnp.sum(e, axis=-1, keepdims=True), approx=True)

        # o = attn @ v in NN form: transpose the 1-vreg v^T (not the 128x128
        # attn), then store the (N, D) result for this batch element.
        v = vT.T                                                  # (N, D)
        o_ref[lo:lo + seq_len, :] = jax.lax.dot_general(
            attn.astype(jnp.bfloat16), v.astype(jnp.bfloat16),
            dimension_numbers=(((1,), (0,)), ((), ())),
            preferred_element_type=jnp.float32)                   # (N, D)


def _batches_per_grid_step(batch):
    """Collapse the grid on single-TC chips; keep grid=(B,) where it maps to
    multiple TensorCores (v7x; v4/v5p megacore)."""
    try:
        kind = jax.devices()[0].device_kind.lower()
    except Exception:  # pragma: no cover - defensive
        kind = ""
    multi_tc = ("v7" in kind) or ("v4" in kind) or ("v5p" in kind)
    return 1 if (multi_tc and batch > 1) else batch


@jax.jit
def self_attention(x, wq, bq, wk, bk, wv, bv):
    """x: (B, N, D); wq/wk/wv: (D, D) PyTorch (D_out, D_in); bq/bk/bv: (1, D)."""
    B, N, D = x.shape

    # Fuse the three projections into one stacked weight / bias (tiny, fused
    # into the jit; no extra kernel launches).
    wqkv = jnp.concatenate([wq, wk, wv], axis=0)                          # (3D, D)
    bqkv = jnp.concatenate(
        [jnp.ravel(bq), jnp.ravel(bk), jnp.ravel(bv)]).reshape(3 * D, 1)  # (3D, 1)

    # Free, layout-preserving reshape (contiguous leading-dim merge): no HBM
    # round trip, unlike a transpose.
    x2 = x.reshape(B * N, D)

    bpg = _batches_per_grid_step(B)          # batch elements per grid step
    grid = (B // bpg,)
    rows_per_step = bpg * N

    out2 = pl.pallas_call(
        functools.partial(_self_attention_kernel, seq_len=N),
        out_shape=jax.ShapeDtypeStruct((B * N, D), jnp.float32),
        grid=grid,
        in_specs=[
            pl.BlockSpec((rows_per_step, D), lambda i: (i, 0)),   # x rows
            pl.BlockSpec((3 * D, D), lambda i: (0, 0)),           # fused Wqkv
            pl.BlockSpec((3 * D, 1), lambda i: (0, 0)),           # fused bias
        ],
        out_specs=pl.BlockSpec((rows_per_step, D), lambda i: (i, 0)),
        compiler_params=pltpu.CompilerParams(
            # Grid steps are independent batch groups: multi-TC chips shard
            # them across TensorCores; single-TC chips see a 1-step "loop".
            dimension_semantics=("parallel",)),
    )(x2, wqkv, bqkv)

    # Free reshape back to the PyTorch (B, N, D) convention.
    return out2.reshape(B, N, D)


def self_attention_ref(x, wq, bq, wk, bk, wv, bv):
    q = jnp.einsum("bnd,ed->bne", x, wq) + bq
    k = jnp.einsum("bnd,ed->bne", x, wk) + bk
    v = jnp.einsum("bnd,ed->bne", x, wv) + bv
    scores = jnp.einsum("bqd,bkd->bqk", q, k) ** (1.0 / 10.0)
    w = jax.nn.softmax(scores, axis=-1)
    return jnp.einsum("bqk,bkd->bqd", w, v)


if __name__ == "__main__":
    # Small shapes consistent with the module's forward: (batch, seq, input_dim).
    # D is a multiple of 8 so the fused-QKV sublane slices stay aligned.
    B, N, D = 2, 128, 8

    key = jax.random.PRNGKey(0)
    kx, kq, kbq, kk, kbk, kv, kbv = jax.random.split(key, 7)

    # Inputs mirror torch.rand (uniform [0,1)); weights/biases are small
    # positive uniforms so every score is strictly positive (the 0.1-power and
    # the no-max softmax both rely on this, exactly like torch.pow would).
    x  = jax.random.uniform(kx,  (B, N, D), dtype=jnp.float32)
    wq = jax.random.uniform(kq,  (D, D), dtype=jnp.float32, minval=0.0, maxval=0.2)
    bq = jax.random.uniform(kbq, (1, D), dtype=jnp.float32, minval=0.0, maxval=0.1)
    wk = jax.random.uniform(kk,  (D, D), dtype=jnp.float32, minval=0.0, maxval=0.2)
    bk = jax.random.uniform(kbk, (1, D), dtype=jnp.float32, minval=0.0, maxval=0.1)
    wv = jax.random.uniform(kv,  (D, D), dtype=jnp.float32, minval=0.0, maxval=0.2)
    bv = jax.random.uniform(kbv, (1, D), dtype=jnp.float32, minval=0.0, maxval=0.1)

    out = self_attention(x, wq, bq, wk, bk, wv, bv)
    out = jax.block_until_ready(out)

    ref = self_attention_ref(x, wq, bq[0], wk, bk[0], wv, bv[0])
    assert out.shape == (B, N, D)
    # Tolerance covers the bf16 MXU operands (the 0.1-power damps relative
    # score error by 10x; measured error is ~1e-3) and the approximate EUP
    # reciprocal (~2^-12 relative) in the softmax normalization.
    assert jnp.allclose(out, ref, atol=5e-3, rtol=5e-3), "mismatch vs reference"

    print("KERNEL_OK")
</pallas_src>

<mosaic_0001>
module attributes {stable_mosaic.version = 11 : i64} {
  func.func @_self_attention_kernel(%arg0: i32, %arg1: memref<256x8xf32, #tpu.memory_space<vmem>>, %arg2: memref<24x8xf32, #tpu.memory_space<vmem>>, %arg3: memref<24x1xf32, #tpu.memory_space<vmem>>, %arg4: memref<256x8xf32, #tpu.memory_space<vmem>>) attributes {dimension_semantics = [#tpu.dimension_semantics<parallel>], iteration_bounds = array<i64: 1>, scalar_prefetch = 0 : i64, scratch_operands = 0 : i64, tpu.core_type = #tpu.core_type<tc>, window_params = [{transform_indices = @transform_0, window_bounds = array<i64: 256, 8>}, {pipeline_mode = #tpu.pipeline_mode<synchronous>, transform_indices = @transform_1, window_bounds = array<i64: 24, 8>}, {pipeline_mode = #tpu.pipeline_mode<synchronous>, transform_indices = @transform_2, window_bounds = array<i64: 24, 1>}, {transform_indices = @transform_3, window_bounds = array<i64: 256, 8>}]} {
    %c0 = arith.constant 0 : index
    %c0_0 = arith.constant 0 : index
    %0 = vector.load %arg1[%c0, %c0_0] : memref<256x8xf32, #tpu.memory_space<vmem>>, vector<256x8xf32>
    %c0_1 = arith.constant 0 : index
    %c0_2 = arith.constant 0 : index
    %1 = vector.load %arg2[%c0_1, %c0_2] : memref<24x8xf32, #tpu.memory_space<vmem>>, vector<24x8xf32>
    %2 = arith.truncf %1 : vector<24x8xf32> to vector<24x8xbf16>
    %3 = arith.truncf %0 : vector<256x8xf32> to vector<256x8xbf16>
    %cst = arith.constant dense<0.000000e+00> : vector<24x256xf32>
    %4 = tpu.matmul %2, %3, %cst {dimension_numbers = #tpu.dot_dimension_numbers<[1], [1], [0], [0], [0, 0, 1, 0], [], []>} : vector<24x8xbf16>, vector<256x8xbf16>, vector<24x256xf32> -> vector<24x256xf32>
    %c0_3 = arith.constant 0 : index
    %c0_4 = arith.constant 0 : index
    %5 = vector.load %arg3[%c0_3, %c0_4] : memref<24x1xf32, #tpu.memory_space<vmem>>, vector<24x1xf32>
    %6 = vector.broadcast %5 : vector<24x1xf32> to vector<24x256xf32>
    %7 = arith.addf %4, %6 : vector<24x256xf32>
    %8 = vector.extract_strided_slice %7 {offsets = [0, 0], sizes = [8, 128], strides = [1, 1]} : vector<24x256xf32> to vector<8x128xf32>
    %9 = vector.extract_strided_slice %7 {offsets = [8, 0], sizes = [8, 128], strides = [1, 1]} : vector<24x256xf32> to vector<8x128xf32>
    %10 = vector.extract_strided_slice %7 {offsets = [16, 0], sizes = [8, 128], strides = [1, 1]} : vector<24x256xf32> to vector<8x128xf32>
    %11 = tpu.transpose %8, [1, 0] : vector<8x128xf32> -> vector<128x8xf32>
    %12 = arith.truncf %11 : vector<128x8xf32> to vector<128x8xbf16>
    %13 = arith.truncf %9 : vector<8x128xf32> to vector<8x128xbf16>
    %cst_5 = arith.constant dense<0.000000e+00> : vector<128x128xf32>
    %14 = tpu.matmul %12, %13, %cst_5 {dimension_numbers = #tpu.dot_dimension_numbers<[1], [0], [0], [1], [0, 0, 1, 1], [], []>} : vector<128x8xbf16>, vector<8x128xbf16>, vector<128x128xf32> -> vector<128x128xf32>
    %15 = math.log %14 : vector<128x128xf32>
    %cst_6 = arith.constant 1.000000e-01 : f32
    %16 = vector.broadcast %cst_6 : f32 to vector<128x128xf32>
    %17 = arith.mulf %16, %15 : vector<128x128xf32>
    %18 = math.exp %17 : vector<128x128xf32>
    %19 = math.exp %18 : vector<128x128xf32>
    %cst_7 = arith.constant dense<0.000000e+00> : vector<128xf32>
    %20 = vector.multi_reduction <add>, %19, %cst_7 [1] : vector<128x128xf32> to vector<128xf32>
    %21 = vector.shape_cast %20 : vector<128xf32> to vector<128x1xf32>
    %22 = tpu.reciprocal %21 {approx = true} : vector<128x1xf32> -> vector<128x1xf32>
    %23 = vector.broadcast %22 : vector<128x1xf32> to vector<128x128xf32>
    %24 = arith.mulf %19, %23 : vector<128x128xf32>
    %25 = tpu.transpose %10, [1, 0] : vector<8x128xf32> -> vector<128x8xf32>
    %26 = arith.truncf %24 : vector<128x128xf32> to vector<128x128xbf16>
    %27 = arith.truncf %25 : vector<128x8xf32> to vector<128x8xbf16>
    %cst_8 = arith.constant dense<0.000000e+00> : vector<128x8xf32>
    %28 = tpu.matmul %26, %27, %cst_8 {dimension_numbers = #tpu.dot_dimension_numbers<[1], [0], [0], [1], [0, 0, 1, 1], [], []>} : vector<128x128xbf16>, vector<128x8xbf16>, vector<128x8xf32> -> vector<128x8xf32>
    %c0_9 = arith.constant 0 : index
    %c0_10 = arith.constant 0 : index
    %29 = vector.load %arg4[%c0_9, %c0_10] : memref<256x8xf32, #tpu.memory_space<vmem>>, vector<128x8xf32>
    tpu.vector_store %arg4[%c0_9, %c0_10], %28 {strides = array<i32>} : memref<256x8xf32, #tpu.memory_space<vmem>>, vector<128x8xf32>,
    %30 = vector.extract_strided_slice %7 {offsets = [0, 128], sizes = [8, 128], strides = [1, 1]} : vector<24x256xf32> to vector<8x128xf32>
    %31 = vector.extract_strided_slice %7 {offsets = [8, 128], sizes = [8, 128], strides = [1, 1]} : vector<24x256xf32> to vector<8x128xf32>
    %32 = vector.extract_strided_slice %7 {offsets = [16, 128], sizes = [8, 128], strides = [1, 1]} : vector<24x256xf32> to vector<8x128xf32>
    %33 = tpu.transpose %30, [1, 0] : vector<8x128xf32> -> vector<128x8xf32>
    %34 = arith.truncf %33 : vector<128x8xf32> to vector<128x8xbf16>
    %35 = arith.truncf %31 : vector<8x128xf32> to vector<8x128xbf16>
    %cst_11 = arith.constant dense<0.000000e+00> : vector<128x128xf32>
    %36 = tpu.matmul %34, %35, %cst_11 {dimension_numbers = #tpu.dot_dimension_numbers<[1], [0], [0], [1], [0, 0, 1, 1], [], []>} : vector<128x8xbf16>, vector<8x128xbf16>, vector<128x128xf32> -> vector<128x128xf32>
    %37 = math.log %36 : vector<128x128xf32>
    %cst_12 = arith.constant 1.000000e-01 : f32
    %38 = vector.broadcast %cst_12 : f32 to vector<128x128xf32>
    %39 = arith.mulf %38, %37 : vector<128x128xf32>
    %40 = math.exp %39 : vector<128x128xf32>
    %41 = math.exp %40 : vector<128x128xf32>
    %cst_13 = arith.constant dense<0.000000e+00> : vector<128xf32>
    %42 = vector.multi_reduction <add>, %41, %cst_13 [1] : vector<128x128xf32> to vector<128xf32>
    %43 = vector.shape_cast %42 : vector<128xf32> to vector<128x1xf32>
    %44 = tpu.reciprocal %43 {approx = true} : vector<128x1xf32> -> vector<128x1xf32>
    %45 = vector.broadcast %44 : vector<128x1xf32> to vector<128x128xf32>
    %46 = arith.mulf %41, %45 : vector<128x128xf32>
    %47 = tpu.transpose %32, [1, 0] : vector<8x128xf32> -> vector<128x8xf32>
    %48 = arith.truncf %46 : vector<128x128xf32> to vector<128x128xbf16>
    %49 = arith.truncf %47 : vector<128x8xf32> to vector<128x8xbf16>
    %cst_14 = arith.constant dense<0.000000e+00> : vector<128x8xf32>
    %50 = tpu.matmul %48, %49, %cst_14 {dimension_numbers = #tpu.dot_dimension_numbers<[1], [0], [0], [1], [0, 0, 1, 1], [], []>} : vector<128x128xbf16>, vector<128x8xbf16>, vector<128x8xf32> -> vector<128x8xf32>
    %c128 = arith.constant 128 : index
    %c0_15 = arith.constant 0 : index
    %51 = vector.load %arg4[%c128, %c0_15] : memref<256x8xf32, #tpu.memory_space<vmem>>, vector<128x8xf32>
    tpu.vector_store %arg4[%c128, %c0_15], %50 {strides = array<i32>} : memref<256x8xf32, #tpu.memory_space<vmem>>, vector<128x8xf32>,
    return
  }
  func.func @transform_0(%arg0: i32) -> (i32, i32) {
    %c0_i32 = arith.constant 0 : i32
    %c0_i32_0 = arith.constant 0 : i32
    return %arg0, %c0_i32 : i32, i32
  }
  func.func @transform_1(%arg0: i32) -> (i32, i32) {
    %c0_i32 = arith.constant 0 : i32
    %c0_i32_0 = arith.constant 0 : i32
    %c0_i32_1 = arith.constant 0 : i32
    return %c0_i32, %c0_i32_0 : i32, i32
  }
  func.func @transform_2(%arg0: i32) -> (i32, i32) {
    %c0_i32 = arith.constant 0 : i32
    %c0_i32_0 = arith.constant 0 : i32
    %c0_i32_1 = arith.constant 0 : i32
    return %c0_i32, %c0_i32_0 : i32, i32
  }
  func.func @transform_3(%arg0: i32) -> (i32, i32) {
    %c0_i32 = arith.constant 0 : i32
    %c0_i32_0 = arith.constant 0 : i32
    return %arg0, %c0_i32 : i32, i32
  }
}

</mosaic_0001>

<llo_original>
// kernel: self_attention.1
$region0: #{self_attention.1}
  #allocation0 [shape = 'u32[]', space=smem, size = 0x4, offset = 0x4, fixed_abs, tag = 'smem constant byte address 0x4 - core index']
  #allocation1 [shape = 'u32[72,128]{1,0:T(1,128)}', space=vmem, size = 0x9000, scoped, tag = 'internal scratch']
  %s0 = inlined_call_operand.vmem [shape: f32[256,8], index: 0, kind: input, shape index: {}]
  %s1 = inlined_call_operand.vmem [shape: f32[24,8], index: 1, kind: input, shape index: {}]
  %s2 = inlined_call_operand.vmem [shape: f32[24,1], index: 2, kind: input, shape index: {}]
  %s3 = inlined_call_operand.vmem [shape: f32[256,8], index: 3, kind: output, shape index: {}]
  %s4 = sld [smem:[#allocation0]]
  $region22: #{self_attention.1} parent=0
    _
  %s6 = ssub.s32 1, %s4
  %s7 = scalar_select 0, %s6, %s4
  // Predicated region
  $region2: #{self_attention.1} parent=0 // pred_check
    _
  $region3: #{self_attention.1} parent=0 // pred_check_branch
    %9 = sbr.rel (0) target = $region5
  $region4: #{self_attention.1} parent=0 // pred_region
    _
  $region5: #{self_attention.1} parent=0 // pred_fallthru
    _
  // Predicated region
  $region6: #{self_attention.1} parent=0 // pred_check
    _
  $region7: #{self_attention.1} parent=0 // pred_check_branch
    %11 = sbr.rel (0) target = $region9
  $region8: #{self_attention.1} parent=0 // pred_region
    _
  $region9: #{self_attention.1} parent=0 // pred_fallthru
    _
  // Predicated region
  $region10: #{self_attention.1} parent=0 // pred_check
    _
  $region11: #{self_attention.1} parent=0 // pred_check_branch
    %13 = sbr.rel (0) target = $region13
  $region12: #{self_attention.1} parent=0 // pred_region
    _
  $region13: #{self_attention.1} parent=0 // pred_fallthru
    _
  %v15 = vld [vmem:[%s0] sm:$0xff]
  %v16 = vld [vmem:[%s0 + $0x8] sm:$0xff]
  %v17 = vld [vmem:[%s0 + $0x10] sm:$0xff]
  %v18 = vld [vmem:[%s0 + $0x18] sm:$0xff]
  %v19 = vld [vmem:[%s0 + $0x20] sm:$0xff]
  %v20 = vld [vmem:[%s0 + $0x28] sm:$0xff]
  %v21 = vld [vmem:[%s0 + $0x30] sm:$0xff]
  %v22 = vld [vmem:[%s0 + $0x38] sm:$0xff]
  %v23 = vld [vmem:[%s0 + $0x40] sm:$0xff]
  %v24 = vld [vmem:[%s0 + $0x48] sm:$0xff]
  %v25 = vld [vmem:[%s0 + $0x50] sm:$0xff]
  %v26 = vld [vmem:[%s0 + $0x58] sm:$0xff]
  %v27 = vld [vmem:[%s0 + $0x60] sm:$0xff]
  %v28 = vld [vmem:[%s0 + $0x68] sm:$0xff]
  %v29 = vld [vmem:[%s0 + $0x70] sm:$0xff]
  %v30 = vld [vmem:[%s0 + $0x78] sm:$0xff]
  %v31 = vld [vmem:[%s0 + $0x80] sm:$0xff]
  %v32 = vld [vmem:[%s0 + $0x88] sm:$0xff]
  %v33 = vld [vmem:[%s0 + $0x90] sm:$0xff]
  %v34 = vld [vmem:[%s0 + $0x98] sm:$0xff]
  %v35 = vld [vmem:[%s0 + $0xa0] sm:$0xff]
  %v36 = vld [vmem:[%s0 + $0xa8] sm:$0xff]
  %v37 = vld [vmem:[%s0 + $0xb0] sm:$0xff]
  %v38 = vld [vmem:[%s0 + $0xb8] sm:$0xff]
  %v39 = vld [vmem:[%s0 + $0xc0] sm:$0xff]
  %v40 = vld [vmem:[%s0 + $0xc8] sm:$0xff]
  %v41 = vld [vmem:[%s0 + $0xd0] sm:$0xff]
  %v42 = vld [vmem:[%s0 + $0xd8] sm:$0xff]
  %v43 = vld [vmem:[%s0 + $0xe0] sm:$0xff]
  %v44 = vld [vmem:[%s0 + $0xe8] sm:$0xff]
  %v45 = vld [vmem:[%s0 + $0xf0] sm:$0xff]
  %v46 = vld [vmem:[%s0 + $0xf8] sm:$0xff]
  %v47 = vld [vmem:[%s1] sm:$0xff]
  %v48 = vld [vmem:[%s1 + $0x8] sm:$0xff]
  %v49 = vld [vmem:[%s1 + $0x10] sm:$0xff]
  %v50 = vpack.c.bf16 %v48, %v47
  %v51 = vpack.c.bf16 %v49, %v49
  %v52 = vpack.c.bf16 %v16, %v15
  %v53 = vpack.c.bf16 %v18, %v17
  %v54 = vpack.c.bf16 %v20, %v19
  %v55 = vpack.c.bf16 %v22, %v21
  %v56 = vpack.c.bf16 %v24, %v23
  %v57 = vpack.c.bf16 %v26, %v25
  %v58 = vpack.c.bf16 %v28, %v27
  %v59 = vpack.c.bf16 %v30, %v29
  %v60 = vpack.c.bf16 %v32, %v31
  %v61 = vpack.c.bf16 %v34, %v33
  %v62 = vpack.c.bf16 %v36, %v35
  %v63 = vpack.c.bf16 %v38, %v37
  %v64 = vpack.c.bf16 %v40, %v39
  %v65 = vpack.c.bf16 %v42, %v41
  %v66 = vpack.c.bf16 %v44, %v43
  %v67 = vpack.c.bf16 %v46, %v45
  %v68 = vld [vmem:[%s2] sm:$0xff]
  %v69 = vld [vmem:[%s2 + $0x8] sm:$0xff]
  %v70 = vld [vmem:[%s2 + $0x10] sm:$0xff]
  %72 = vset.pattern.permute.xlu0 0
  %73 = vperm.xlu0 %72, %v68
  %v74 = vpop.permute.xlu0 %73
  %77 = vset.pattern.permute.xlu0 0
  %78 = vperm.xlu0 %77, %v69
  %v79 = vpop.permute.xlu0 %78
  %82 = vset.pattern.permute.xlu0 0
  %83 = vperm.xlu0 %82, %v70
  %v84 = vpop.permute.xlu0 %83
  %vm86 = vcmask 64512
  %v88 = vsel %vm86, %v50, 0
  %v91 = vsel %vm86, %v51, 0
  %v94 = vsel %vm86, %v52, 0
  %v97 = vsel %vm86, %v53, 0
  %v100 = vsel %vm86, %v54, 0
  %v103 = vsel %vm86, %v55, 0
  %v106 = vsel %vm86, %v56, 0
  %v109 = vsel %vm86, %v57, 0
  %v112 = vsel %vm86, %v58, 0
  %v115 = vsel %vm86, %v59, 0
  %v118 = vsel %vm86, %v60, 0
  %v121 = vsel %vm86, %v61, 0
  %v124 = vsel %vm86, %v62, 0
  %v127 = vsel %vm86, %v63, 0
  %v130 = vsel %vm86, %v64, 0
  %v133 = vsel %vm86, %v65, 0
  %v136 = vsel %vm86, %v66, 0
  %v139 = vsel %vm86, %v67, 0
  %141 = vmatpush.bf16.xpose.msra.mxu0 %v115
  %142 = vmatpush.bf16.xpose.msra.mxu0 %v112
  %143 = vmatpush.bf16.xpose.msra.mxu0 %v109
  %144 = vmatpush.bf16.xpose.msra.mxu0 %v106
  %145 = vmatpush.bf16.xpose.msra.mxu0 %v103
  %146 = vmatpush.bf16.xpose.msra.mxu0 %v100
  %147 = vmatpush.bf16.xpose.msra.mxu0 %v97
  %148 = vmatpush.bf16.xpose.msra.mxu0 %v94
  %149 = vmatmul.bf16.gmra.mxu0 %v88
  %v150 = vpop.f32.mrf.mxu0
  %v151 = vadd.f32 %v74, %v150
  %v152 = vpop.f32.mrf.mxu0
  %v153 = vadd.f32 %v79, %v152
  %154 = vmatmul.bf16.gmra.mxu0 %v91
  %v155 = vpop.f32.mrf.mxu0
  %v156 = vadd.f32 %v84, %v155
  %v157 = vpop.f32.mrf.mxu0
  %158 = vdwg.mxu0
  %159 = vmatpush.bf16.xpose.msra.mxu0 %v139
  %160 = vmatpush.bf16.xpose.msra.mxu0 %v136
  %161 = vmatpush.bf16.xpose.msra.mxu0 %v133
  %162 = vmatpush.bf16.xpose.msra.mxu0 %v130
  %163 = vmatpush.bf16.xpose.msra.mxu0 %v127
  %164 = vmatpush.bf16.xpose.msra.mxu0 %v124
  %165 = vmatpush.bf16.xpose.msra.mxu0 %v121
  %166 = vmatpush.bf16.xpose.msra.mxu0 %v118
  %167 = vmatmul.bf16.gmra.mxu0 %v88
  %v168 = vpop.f32.mrf.mxu0
  %v169 = vadd.f32 %v74, %v168
  %v170 = vpop.f32.mrf.mxu0
  %v171 = vadd.f32 %v79, %v170
  %172 = vmatmul.bf16.gmra.mxu0 %v91
  %v173 = vpop.f32.mrf.mxu0
  %v174 = vadd.f32 %v84, %v173
  %v175 = vpop.f32.mrf.mxu0
  %176 = vdwg.mxu0
  %177 = vxpose.xlu0.b32.start [1/16] %v151, 128
  %178 = vxpose.xlu0.b32.cont [2/16] 0.0, 128
  %179 = vxpose.xlu0.b32.cont [3/16] 0.0, 128
  %180 = vxpose.xlu0.b32.cont [4/16] 0.0, 128
  %181 = vxpose.xlu0.b32.cont [5/16] 0.0, 128
  %182 = vxpose.xlu0.b32.cont [6/16] 0.0, 128
  %183 = vxpose.xlu0.b32.cont [7/16] 0.0, 128
  %184 = vxpose.xlu0.b32.cont [8/16] 0.0, 128
  %185 = vxpose.xlu0.b32.cont [9/16] 0.0, 128
  %186 = vxpose.xlu0.b32.cont [10/16] 0.0, 128
  %187 = vxpose.xlu0.b32.cont [11/16] 0.0, 128
  %188 = vxpose.xlu0.b32.cont [12/16] 0.0, 128
  %189 = vxpose.xlu0.b32.cont [13/16] 0.0, 128
  %190 = vxpose.xlu0.b32.cont [14/16] 0.0, 128
  %191 = vxpose.xlu0.b32.cont [15/16] 0.0, 128
  %192 = vxpose.xlu0.b32.end [16/16] 0.0, 128
  %v193 = vpop.trf.xlu0
  %v194 = vpop.trf.xlu0
  %v195 = vpop.trf.xlu0
  %v196 = vpop.trf.xlu0
  %v197 = vpop.trf.xlu0
  %v198 = vpop.trf.xlu0
  %v199 = vpop.trf.xlu0
  %v200 = vpop.trf.xlu0
  %v201 = vpop.trf.xlu0
  %v202 = vpop.trf.xlu0
  %v203 = vpop.trf.xlu0
  %v204 = vpop.trf.xlu0
  %v205 = vpop.trf.xlu0
  %v206 = vpop.trf.xlu0
  %v207 = vpop.trf.xlu0
  %v208 = vpop.trf.xlu0
  %v209 = vpack.c.bf16 %v194, %v193
  %v210 = vpack.c.bf16 %v196, %v195
  %v211 = vpack.c.bf16 %v198, %v197
  %v212 = vpack.c.bf16 %v200, %v199
  %v213 = vpack.c.bf16 %v202, %v201
  %v214 = vpack.c.bf16 %v204, %v203
  %v215 = vpack.c.bf16 %v206, %v205
  %v216 = vpack.c.bf16 %v208, %v207
  %v217 = vpack.c.bf16 %v153, %v153
  %v219 = vsel %vm86, %v209, 0
  %v222 = vsel %vm86, %v210, 0
  %v225 = vsel %vm86, %v211, 0
  %v228 = vsel %vm86, %v212, 0
  %v231 = vsel %vm86, %v213, 0
  %v234 = vsel %vm86, %v214, 0
  %v237 = vsel %vm86, %v215, 0
  %v240 = vsel %vm86, %v216, 0
  %vm242 = vcmask 1043456
  %v244 = vsel %vm242, %v217, 0
  %246 = vmatpush.bf16.msra.mxu0 0
  %247 = vmatpush.bf16.msra.mxu0 0
  %248 = vmatpush.bf16.msra.mxu0 0
  %249 = vmatpush.bf16.msra.mxu0 0
  %250 = vmatpush.bf16.msra.mxu0 0
  %251 = vmatpush.bf16.msra.mxu0 0
  %252 = vmatpush.bf16.msra.mxu0 0
  %253 = vmatpush.bf16.msra.mxu0 %v244
  %254 = vmatmul.bf16.gmra.mxu0 %v219
  %v255 = vpop.f32.mrf.mxu0
  %v256 = vadd.f32 0.0, %v255
  %v257 = vpop.f32.mrf.mxu0
  %v258 = vadd.f32 0.0, %v257
  %259 = vmatmul.bf16.gmra.mxu0 %v222
  %v260 = vpop.f32.mrf.mxu0
  %v261 = vadd.f32 0.0, %v260
  %v262 = vpop.f32.mrf.mxu0
  %v263 = vadd.f32 0.0, %v262
  %264 = vmatmul.bf16.gmra.mxu0 %v225
  %v265 = vpop.f32.mrf.mxu0
  %v266 = vadd.f32 0.0, %v265
  %v267 = vpop.f32.mrf.mxu0
  %v268 = vadd.f32 0.0, %v267
  %269 = vmatmul.bf16.gmra.mxu0 %v228
  %v270 = vpop.f32.mrf.mxu0
  %v271 = vadd.f32 0.0, %v270
  %v272 = vpop.f32.mrf.mxu0
  %v273 = vadd.f32 0.0, %v272
  %274 = vmatmul.bf16.gmra.mxu0 %v231
  %v275 = vpop.f32.mrf.mxu0
  %v276 = vadd.f32 0.0, %v275
  %v277 = vpop.f32.mrf.mxu0
  %v278 = vadd.f32 0.0, %v277
  %279 = vmatmul.bf16.gmra.mxu0 %v234
  %v280 = vpop.f32.mrf.mxu0
  %v281 = vadd.f32 0.0, %v280
  %v282 = vpop.f32.mrf.mxu0
  %v283 = vadd.f32 0.0, %v282
  %284 = vmatmul.bf16.gmra.mxu0 %v237
  %v285 = vpop.f32.mrf.mxu0
  %v286 = vadd.f32 0.0, %v285
  %v287 = vpop.f32.mrf.mxu0
  %v288 = vadd.f32 0.0, %v287
  %289 = vmatmul.bf16.gmra.mxu0 %v240
  %v290 = vpop.f32.mrf.mxu0
  %v291 = vadd.f32 0.0, %v290
  %v292 = vpop.f32.mrf.mxu0
  %v293 = vadd.f32 0.0, %v292
  %294 = vdwg.mxu0
  %v295 = vlog2.pop %v256
  %v296 = vmul.f32 %v295, 0.6931472
  %v297 = vlog2.pop %v258
  %v298 = vmul.f32 %v297, 0.6931472
  %v299 = vlog2.pop %v261
  %v300 = vmul.f32 %v299, 0.6931472
  %v301 = vlog2.pop %v263
  %v302 = vmul.f32 %v301, 0.6931472
  %v303 = vlog2.pop %v266
  %v304 = vmul.f32 %v303, 0.6931472
  %v305 = vlog2.pop %v268
  %v306 = vmul.f32 %v305, 0.6931472
  %v307 = vlog2.pop %v271
  %v308 = vmul.f32 %v307, 0.6931472
  %v309 = vlog2.pop %v273
  %v310 = vmul.f32 %v309, 0.6931472
  %v311 = vlog2.pop %v276
  %v312 = vmul.f32 %v311, 0.6931472
  %v313 = vlog2.pop %v278
  %v314 = vmul.f32 %v313, 0.6931472
  %v315 = vlog2.pop %v281
  %v316 = vmul.f32 %v315, 0.6931472
  %v317 = vlog2.pop %v283
  %v318 = vmul.f32 %v317, 0.6931472
  %v319 = vlog2.pop %v286
  %v320 = vmul.f32 %v319, 0.6931472
  %v321 = vlog2.pop %v288
  %v322 = vmul.f32 %v321, 0.6931472
  %v323 = vlog2.pop %v291
  %v324 = vmul.f32 %v323, 0.6931472
  %v325 = vlog2.pop %v293
  %v326 = vmul.f32 %v325, 0.6931472
  %v327 = vmul.f32 %v296, 0.1
  %v328 = vmul.f32 %v298, 0.1
  %v329 = vmul.f32 %v300, 0.1
  %v330 = vmul.f32 %v302, 0.1
  %v331 = vmul.f32 %v304, 0.1
  %v332 = vmul.f32 %v306, 0.1
  %v333 = vmul.f32 %v308, 0.1
  %v334 = vmul.f32 %v310, 0.1
  %v335 = vmul.f32 %v312, 0.1
  %v336 = vmul.f32 %v314, 0.1
  %v337 = vmul.f32 %v316, 0.1
  %v338 = vmul.f32 %v318, 0.1
  %v339 = vmul.f32 %v320, 0.1
  %v340 = vmul.f32 %v322, 0.1
  %v341 = vmul.f32 %v324, 0.1
  %v342 = vmul.f32 %v326, 0.1
  %v343 = vmul.f32 %v327, 1.442695
  %v344 = vpow.pop %v343
  %v345 = vmul.f32 %v328, 1.442695
  %v346 = vpow.pop %v345
  %v347 = vmul.f32 %v329, 1.442695
  %v348 = vpow.pop %v347
  %v349 = vmul.f32 %v330, 1.442695
  %v350 = vpow.pop %v349
  %v351 = vmul.f32 %v331, 1.442695
  %v352 = vpow.pop %v351
  %v353 = vmul.f32 %v332, 1.442695
  %v354 = vpow.pop %v353
  %v355 = vmul.f32 %v333, 1.442695
  %v356 = vpow.pop %v355
  %v357 = vmul.f32 %v334, 1.442695
  %v358 = vpow.pop %v357
  %v359 = vmul.f32 %v335, 1.442695
  %v360 = vpow.pop %v359
  %v361 = vmul.f32 %v336, 1.442695
  %v362 = vpow.pop %v361
  %v363 = vmul.f32 %v337, 1.442695
  %v364 = vpow.pop %v363
  %v365 = vmul.f32 %v338, 1.442695
  %v366 = vpow.pop %v365
  %v367 = vmul.f32 %v339, 1.442695
  %v368 = vpow.pop %v367
  %v369 = vmul.f32 %v340, 1.442695
  %v370 = vpow.pop %v369
  %v371 = vmul.f32 %v341, 1.442695
  %v372 = vpow.pop %v371
  %v373 = vmul.f32 %v342, 1.442695
  %v374 = vpow.pop %v373
  %v375 = vmul.f32 %v344, 1.442695
  %v376 = vpow.pop %v375
  %v377 = vmul.f32 %v346, 1.442695
  %v378 = vpow.pop %v377
  %v379 = vmul.f32 %v348, 1.442695
  %v380 = vpow.pop %v379
  %v381 = vmul.f32 %v350, 1.442695
  %v382 = vpow.pop %v381
  %v383 = vmul.f32 %v352, 1.442695
  %v384 = vpow.pop %v383
  %v385 = vmul.f32 %v354, 1.442695
  %v386 = vpow.pop %v385
  %v387 = vmul.f32 %v356, 1.442695
  %v388 = vpow.pop %v387
  %v389 = vmul.f32 %v358, 1.442695
  %v390 = vpow.pop %v389
  %v391 = vmul.f32 %v360, 1.442695
  %v392 = vpow.pop %v391
  %v393 = vmul.f32 %v362, 1.442695
  %v394 = vpow.pop %v393
  %v395 = vmul.f32 %v364, 1.442695
  %v396 = vpow.pop %v395
  %v397 = vmul.f32 %v366, 1.442695
  %v398 = vpow.pop %v397
  %v399 = vmul.f32 %v368, 1.442695
  %v400 = vpow.pop %v399
  %v401 = vmul.f32 %v370, 1.442695
  %v402 = vpow.pop %v401
  %v403 = vmul.f32 %v372, 1.442695
  %v404 = vpow.pop %v403
  %v405 = vmul.f32 %v374, 1.442695
  %v406 = vpow.pop %v405
  %407 = vadd.xlane.f32.xlu0 %v376
  %v408 = vpop.xlane.xlu0 %407
  %409 = vadd.xlane.f32.xlu0 %v378
  %v410 = vpop.xlane.xlu0 %409
  %411 = vadd.xlane.f32.xlu0 %v380
  %v412 = vpop.xlane.xlu0 %411
  %413 = vadd.xlane.f32.xlu0 %v382
  %v414 = vpop.xlane.xlu0 %413
  %415 = vadd.xlane.f32.xlu0 %v384
  %v416 = vpop.xlane.xlu0 %415
  %417 = vadd.xlane.f32.xlu0 %v386
  %v418 = vpop.xlane.xlu0 %417
  %419 = vadd.xlane.f32.xlu0 %v388
  %v420 = vpop.xlane.xlu0 %419
  %421 = vadd.xlane.f32.xlu0 %v390
  %v422 = vpop.xlane.xlu0 %421
  %423 = vadd.xlane.f32.xlu0 %v392
  %v424 = vpop.xlane.xlu0 %423
  %425 = vadd.xlane.f32.xlu0 %v394
  %v426 = vpop.xlane.xlu0 %425
  %427 = vadd.xlane.f32.xlu0 %v396
  %v428 = vpop.xlane.xlu0 %427
  %429 = vadd.xlane.f32.xlu0 %v398
  %v430 = vpop.xlane.xlu0 %429
  %431 = vadd.xlane.f32.xlu0 %v400
  %v432 = vpop.xlane.xlu0 %431
  %433 = vadd.xlane.f32.xlu0 %v402
  %v434 = vpop.xlane.xlu0 %433
  %435 = vadd.xlane.f32.xlu0 %v404
  %v436 = vpop.xlane.xlu0 %435
  %437 = vadd.xlane.f32.xlu0 %v406
  %v438 = vpop.xlane.xlu0 %437
  %v439 = vrcp.pop %v408
  %v440 = vrcp.pop %v410
  %v441 = vrcp.pop %v412
  %v442 = vrcp.pop %v414
  %v443 = vrcp.pop %v416
  %v444 = vrcp.pop %v418
  %v445 = vrcp.pop %v420
  %v446 = vrcp.pop %v422
  %v447 = vrcp.pop %v424
  %v448 = vrcp.pop %v426
  %v449 = vrcp.pop %v428
  %v450 = vrcp.pop %v430
  %v451 = vrcp.pop %v432
  %v452 = vrcp.pop %v434
  %v453 = vrcp.pop %v436
  %v454 = vrcp.pop %v438
  %v455 = vmul.f32 %v376, %v439
  %v456 = vmul.f32 %v378, %v440
  %v457 = vmul.f32 %v380, %v441
  %v458 = vmul.f32 %v382, %v442
  %v459 = vmul.f32 %v384, %v443
  %v460 = vmul.f32 %v386, %v444
  %v461 = vmul.f32 %v388, %v445
  %v462 = vmul.f32 %v390, %v446
  %v463 = vmul.f32 %v392, %v447
  %v464 = vmul.f32 %v394, %v448
  %v465 = vmul.f32 %v396, %v449
  %v466 = vmul.f32 %v398, %v450
  %v467 = vmul.f32 %v400, %v451
  %v468 = vmul.f32 %v402, %v452
  %v469 = vmul.f32 %v404, %v453
  %v470 = vmul.f32 %v406, %v454
  %471 = vxpose.xlu0.b32.start [1/16] %v156, 128
  %472 = vxpose.xlu0.b32.cont [2/16] 0.0, 128
  %473 = vxpose.xlu0.b32.cont [3/16] 0.0, 128
  %474 = vxpose.xlu0.b32.cont [4/16] 0.0, 128
  %475 = vxpose.xlu0.b32.cont [5/16] 0.0, 128
  %476 = vxpose.xlu0.b32.cont [6/16] 0.0, 128
  %477 = vxpose.xlu0.b32.cont [7/16] 0.0, 128
  %478 = vxpose.xlu0.b32.cont [8/16] 0.0, 128
  %479 = vxpose.xlu0.b32.cont [9/16] 0.0, 128
  %480 = vxpose.xlu0.b32.cont [10/16] 0.0, 128
  %481 = vxpose.xlu0.b32.cont [11/16] 0.0, 128
  %482 = vxpose.xlu0.b32.cont [12/16] 0.0, 128
  %483 = vxpose.xlu0.b32.cont [13/16] 0.0, 128
  %484 = vxpose.xlu0.b32.cont [14/16] 0.0, 128
  %485 = vxpose.xlu0.b32.cont [15/16] 0.0, 128
  %486 = vxpose.xlu0.b32.end [16/16] 0.0, 128
  %v487 = vpop.trf.xlu0
  %v488 = vpop.trf.xlu0
  %v489 = vpop.trf.xlu0
  %v490 = vpop.trf.xlu0
  %v491 = vpop.trf.xlu0
  %v492 = vpop.trf.xlu0
  %v493 = vpop.trf.xlu0
  %v494 = vpop.trf.xlu0
  %v495 = vpop.trf.xlu0
  %v496 = vpop.trf.xlu0
  %v497 = vpop.trf.xlu0
  %v498 = vpop.trf.xlu0
  %v499 = vpop.trf.xlu0
  %v500 = vpop.trf.xlu0
  %v501 = vpop.trf.xlu0
  %v502 = vpop.trf.xlu0
  %v503 = vpack.c.bf16 %v456, %v455
  %v504 = vpack.c.bf16 %v458, %v457
  %v505 = vpack.c.bf16 %v460, %v459
  %v506 = vpack.c.bf16 %v462, %v461
  %v507 = vpack.c.bf16 %v464, %v463
  %v508 = vpack.c.bf16 %v466, %v465
  %v509 = vpack.c.bf16 %v468, %v467
  %v510 = vpack.c.bf16 %v470, %v469
  %v511 = vpack.c.bf16 %v488, %v487
  %v512 = vpack.c.bf16 %v490, %v489
  %v513 = vpack.c.bf16 %v492, %v491
  %v514 = vpack.c.bf16 %v494, %v493
  %v515 = vpack.c.bf16 %v496, %v495
  %v516 = vpack.c.bf16 %v498, %v497
  %v517 = vpack.c.bf16 %v500, %v499
  %v518 = vpack.c.bf16 %v502, %v501
  %519 = vmatpush.bf16.msra.mxu0 %v518
  %520 = vmatpush.bf16.msra.mxu0 %v517
  %521 = vmatpush.bf16.msra.mxu0 %v516
  %522 = vmatpush.bf16.msra.mxu0 %v515
  %523 = vmatpush.bf16.msra.mxu0 %v514
  %524 = vmatpush.bf16.msra.mxu0 %v513
  %525 = vmatpush.bf16.msra.mxu0 %v512
  %526 = vmatpush.bf16.msra.mxu0 %v511
  %527 = vmatmul.bf16.gmra.mxu0 %v503
  %v528 = vpop.f32.mrf.mxu0
  %v529 = vadd.f32 0.0, %v528
  %v530 = vpop.f32.mrf.mxu0
  %v531 = vadd.f32 0.0, %v530
  %532 = vmatmul.bf16.gmra.mxu0 %v504
  %v533 = vpop.f32.mrf.mxu0
  %v534 = vadd.f32 0.0, %v533
  %v535 = vpop.f32.mrf.mxu0
  %v536 = vadd.f32 0.0, %v535
  %537 = vmatmul.bf16.gmra.mxu0 %v505
  %v538 = vpop.f32.mrf.mxu0
  %v539 = vadd.f32 0.0, %v538
  %v540 = vpop.f32.mrf.mxu0
  %v541 = vadd.f32 0.0, %v540
  %542 = vmatmul.bf16.gmra.mxu0 %v506
  %v543 = vpop.f32.mrf.mxu0
  %v544 = vadd.f32 0.0, %v543
  %v545 = vpop.f32.mrf.mxu0
  %v546 = vadd.f32 0.0, %v545
  %547 = vmatmul.bf16.gmra.mxu0 %v507
  %v548 = vpop.f32.mrf.mxu0
  %v549 = vadd.f32 0.0, %v548
  %v550 = vpop.f32.mrf.mxu0
  %v551 = vadd.f32 0.0, %v550
  %552 = vmatmul.bf16.gmra.mxu0 %v508
  %v553 = vpop.f32.mrf.mxu0
  %v554 = vadd.f32 0.0, %v553
  %v555 = vpop.f32.mrf.mxu0
  %v556 = vadd.f32 0.0, %v555
  %557 = vmatmul.bf16.gmra.mxu0 %v509
  %v558 = vpop.f32.mrf.mxu0
  %v559 = vadd.f32 0.0, %v558
  %v560 = vpop.f32.mrf.mxu0
  %v561 = vadd.f32 0.0, %v560
  %562 = vmatmul.bf16.gmra.mxu0 %v510
  %v563 = vpop.f32.mrf.mxu0
  %v564 = vadd.f32 0.0, %v563
  %v565 = vpop.f32.mrf.mxu0
  %v566 = vadd.f32 0.0, %v565
  %567 = vdwg.mxu0
  %568 = vst.msk [vmem:[%s3] sm:$0xff] %vm86, %v529
  %569 = vst.msk [vmem:[%s3 + $0x8] sm:$0xff] %vm86, %v531
  %570 = vst.msk [vmem:[%s3 + $0x10] sm:$0xff] %vm86, %v534
  %571 = vst.msk [vmem:[%s3 + $0x18] sm:$0xff] %vm86, %v536
  %572 = vst.msk [vmem:[%s3 + $0x20] sm:$0xff] %vm86, %v539
  %573 = vst.msk [vmem:[%s3 + $0x28] sm:$0xff] %vm86, %v541
  %574 = vst.msk [vmem:[%s3 + $0x30] sm:$0xff] %vm86, %v544
  %575 = vst.msk [vmem:[%s3 + $0x38] sm:$0xff] %vm86, %v546
  %576 = vst.msk [vmem:[%s3 + $0x40] sm:$0xff] %vm86, %v549
  %577 = vst.msk [vmem:[%s3 + $0x48] sm:$0xff] %vm86, %v551
  %578 = vst.msk [vmem:[%s3 + $0x50] sm:$0xff] %vm86, %v554
  %579 = vst.msk [vmem:[%s3 + $0x58] sm:$0xff] %vm86, %v556
  %580 = vst.msk [vmem:[%s3 + $0x60] sm:$0xff] %vm86, %v559
  %581 = vst.msk [vmem:[%s3 + $0x68] sm:$0xff] %vm86, %v561
  %582 = vst.msk [vmem:[%s3 + $0x70] sm:$0xff] %vm86, %v564
  %583 = vst.msk [vmem:[%s3 + $0x78] sm:$0xff] %vm86, %v566
  %584 = vxpose.xlu0.b32.start [1/16] %v169, 128
  %585 = vxpose.xlu0.b32.cont [2/16] 0.0, 128
  %586 = vxpose.xlu0.b32.cont [3/16] 0.0, 128
  %587 = vxpose.xlu0.b32.cont [4/16] 0.0, 128
  %588 = vxpose.xlu0.b32.cont [5/16] 0.0, 128
  %589 = vxpose.xlu0.b32.cont [6/16] 0.0, 128
  %590 = vxpose.xlu0.b32.cont [7/16] 0.0, 128
  %591 = vxpose.xlu0.b32.cont [8/16] 0.0, 128
  %592 = vxpose.xlu0.b32.cont [9/16] 0.0, 128
  %593 = vxpose.xlu0.b32.cont [10/16] 0.0, 128
  %594 = vxpose.xlu0.b32.cont [11/16] 0.0, 128
  %595 = vxpose.xlu0.b32.cont [12/16] 0.0, 128
  %596 = vxpose.xlu0.b32.cont [13/16] 0.0, 128
  %597 = vxpose.xlu0.b32.cont [14/16] 0.0, 128
  %598 = vxpose.xlu0.b32.cont [15/16] 0.0, 128
  %599 = vxpose.xlu0.b32.end [16/16] 0.0, 128
  %v600 = vpop.trf.xlu0
  %v601 = vpop.trf.xlu0
  %v602 = vpop.trf.xlu0
  %v603 = vpop.trf.xlu0
  %v604 = vpop.trf.xlu0
  %v605 = vpop.trf.xlu0
  %v606 = vpop.trf.xlu0
  %v607 = vpop.trf.xlu0
  %v608 = vpop.trf.xlu0
  %v609 = vpop.trf.xlu0
  %v610 = vpop.trf.xlu0
  %v611 = vpop.trf.xlu0
  %v612 = vpop.trf.xlu0
  %v613 = vpop.trf.xlu0
  %v614 = vpop.trf.xlu0
  %v615 = vpop.trf.xlu0
  %v616 = vpack.c.bf16 %v601, %v600
  %v617 = vpack.c.bf16 %v603, %v602
  %v618 = vpack.c.bf16 %v605, %v604
  %v619 = vpack.c.bf16 %v607, %v606
  %v620 = vpack.c.bf16 %v609, %v608
  %v621 = vpack.c.bf16 %v611, %v610
  %v622 = vpack.c.bf16 %v613, %v612
  %v623 = vpack.c.bf16 %v615, %v614
  %v624 = vpack.c.bf16 %v171, %v171
  %v626 = vsel %vm86, %v616, 0
  %v629 = vsel %vm86, %v617, 0
  %v632 = vsel %vm86, %v618, 0
  %v635 = vsel %vm86, %v619, 0
  %v638 = vsel %vm86, %v620, 0
  %v641 = vsel %vm86, %v621, 0
  %v644 = vsel %vm86, %v622, 0
  %v647 = vsel %vm86, %v623, 0
  %v650 = vsel %vm242, %v624, 0
  %652 = vmatpush.bf16.msra.mxu0 0
  %653 = vmatpush.bf16.msra.mxu0 0
  %654 = vmatpush.bf16.msra.mxu0 0
  %655 = vmatpush.bf16.msra.mxu0 0
  %656 = vmatpush.bf16.msra.mxu0 0
  %657 = vmatpush.bf16.msra.mxu0 0
  %658 = vmatpush.bf16.msra.mxu0 0
  %659 = vmatpush.bf16.msra.mxu0 %v650
  %660 = vmatmul.bf16.gmra.mxu0 %v626
  %v661 = vpop.f32.mrf.mxu0
  %v662 = vadd.f32 0.0, %v661
  %v663 = vpop.f32.mrf.mxu0
  %v664 = vadd.f32 0.0, %v663
  %665 = vmatmul.bf16.gmra.mxu0 %v629
  %v666 = vpop.f32.mrf.mxu0
  %v667 = vadd.f32 0.0, %v666
  %v668 = vpop.f32.mrf.mxu0
  %v669 = vadd.f32 0.0, %v668
  %670 = vmatmul.bf16.gmra.mxu0 %v632
  %v671 = vpop.f32.mrf.mxu0
  %v672 = vadd.f32 0.0, %v671
  %v673 = vpop.f32.mrf.mxu0
  %v674 = vadd.f32 0.0, %v673
  %675 = vmatmul.bf16.gmra.mxu0 %v635
  %v676 = vpop.f32.mrf.mxu0
  %v677 = vadd.f32 0.0, %v676
  %v678 = vpop.f32.mrf.mxu0
  %v679 = vadd.f32 0.0, %v678
  %680 = vmatmul.bf16.gmra.mxu0 %v638
  %v681 = vpop.f32.mrf.mxu0
  %v682 = vadd.f32 0.0, %v681
  %v683 = vpop.f32.mrf.mxu0
  %v684 = vadd.f32 0.0, %v683
  %685 = vmatmul.bf16.gmra.mxu0 %v641
  %v686 = vpop.f32.mrf.mxu0
  %v687 = vadd.f32 0.0, %v686
  %v688 = vpop.f32.mrf.mxu0
  %v689 = vadd.f32 0.0, %v688
  %690 = vmatmul.bf16.gmra.mxu0 %v644
  %v691 = vpop.f32.mrf.mxu0
  %v692 = vadd.f32 0.0, %v691
  %v693 = vpop.f32.mrf.mxu0
  %v694 = vadd.f32 0.0, %v693
  %695 = vmatmul.bf16.gmra.mxu0 %v647
  %v696 = vpop.f32.mrf.mxu0
  %v697 = vadd.f32 0.0, %v696
  %v698 = vpop.f32.mrf.mxu0
  %v699 = vadd.f32 0.0, %v698
  %700 = vdwg.mxu0
  %v701 = vlog2.pop %v662
  %v702 = vmul.f32 %v701, 0.6931472
  %v703 = vlog2.pop %v664
  %v704 = vmul.f32 %v703, 0.6931472
  %v705 = vlog2.pop %v667
  %v706 = vmul.f32 %v705, 0.6931472
  %v707 = vlog2.pop %v669
  %v708 = vmul.f32 %v707, 0.6931472
  %v709 = vlog2.pop %v672
  %v710 = vmul.f32 %v709, 0.6931472
  %v711 = vlog2.pop %v674
  %v712 = vmul.f32 %v711, 0.6931472
  %v713 = vlog2.pop %v677
  %v714 = vmul.f32 %v713, 0.6931472
  %v715 = vlog2.pop %v679
  %v716 = vmul.f32 %v715, 0.6931472
  %v717 = vlog2.pop %v682
  %v718 = vmul.f32 %v717, 0.6931472
  %v719 = vlog2.pop %v684
  %v720 = vmul.f32 %v719, 0.6931472
  %v721 = vlog2.pop %v687
  %v722 = vmul.f32 %v721, 0.6931472
  %v723 = vlog2.pop %v689
  %v724 = vmul.f32 %v723, 0.6931472
  %v725 = vlog2.pop %v692
  %v726 = vmul.f32 %v725, 0.6931472
  %v727 = vlog2.pop %v694
  %v728 = vmul.f32 %v727, 0.6931472
  %v729 = vlog2.pop %v697
  %v730 = vmul.f32 %v729, 0.6931472
  %v731 = vlog2.pop %v699
  %v732 = vmul.f32 %v731, 0.6931472
  %v733 = vmul.f32 %v702, 0.1
  %v734 = vmul.f32 %v704, 0.1
  %v735 = vmul.f32 %v706, 0.1
  %v736 = vmul.f32 %v708, 0.1
  %v737 = vmul.f32 %v710, 0.1
  %v738 = vmul.f32 %v712, 0.1
  %v739 = vmul.f32 %v714, 0.1
  %v740 = vmul.f32 %v716, 0.1
  %v741 = vmul.f32 %v718, 0.1
  %v742 = vmul.f32 %v720, 0.1
  %v743 = vmul.f32 %v722, 0.1
  %v744 = vmul.f32 %v724, 0.1
  %v745 = vmul.f32 %v726, 0.1
  %v746 = vmul.f32 %v728, 0.1
  %v747 = vmul.f32 %v730, 0.1
  %v748 = vmul.f32 %v732, 0.1
  %v749 = vmul.f32 %v733, 1.442695
  %v750 = vpow.pop %v749
  %v751 = vmul.f32 %v734, 1.442695
  %v752 = vpow.pop %v751
  %v753 = vmul.f32 %v735, 1.442695
  %v754 = vpow.pop %v753
  %v755 = vmul.f32 %v736, 1.442695
  %v756 = vpow.pop %v755
  %v757 = vmul.f32 %v737, 1.442695
  %v758 = vpow.pop %v757
  %v759 = vmul.f32 %v738, 1.442695
  %v760 = vpow.pop %v759
  %v761 = vmul.f32 %v739, 1.442695
  %v762 = vpow.pop %v761
  %v763 = vmul.f32 %v740, 1.442695
  %v764 = vpow.pop %v763
  %v765 = vmul.f32 %v741, 1.442695
  %v766 = vpow.pop %v765
  %v767 = vmul.f32 %v742, 1.442695
  %v768 = vpow.pop %v767
  %v769 = vmul.f32 %v743, 1.442695
  %v770 = vpow.pop %v769
  %v771 = vmul.f32 %v744, 1.442695
  %v772 = vpow.pop %v771
  %v773 = vmul.f32 %v745, 1.442695
  %v774 = vpow.pop %v773
  %v775 = vmul.f32 %v746, 1.442695
  %v776 = vpow.pop %v775
  %v777 = vmul.f32 %v747, 1.442695
  %v778 = vpow.pop %v777
  %v779 = vmul.f32 %v748, 1.442695
  %v780 = vpow.pop %v779
  %v781 = vmul.f32 %v750, 1.442695
  %v782 = vpow.pop %v781
  %v783 = vmul.f32 %v752, 1.442695
  %v784 = vpow.pop %v783
  %v785 = vmul.f32 %v754, 1.442695
  %v786 = vpow.pop %v785
  %v787 = vmul.f32 %v756, 1.442695
  %v788 = vpow.pop %v787
  %v789 = vmul.f32 %v758, 1.442695
  %v790 = vpow.pop %v789
  %v791 = vmul.f32 %v760, 1.442695
  %v792 = vpow.pop %v791
  %v793 = vmul.f32 %v762, 1.442695
  %v794 = vpow.pop %v793
  %v795 = vmul.f32 %v764, 1.442695
  %v796 = vpow.pop %v795
  %v797 = vmul.f32 %v766, 1.442695
  %v798 = vpow.pop %v797
  %v799 = vmul.f32 %v768, 1.442695
  %v800 = vpow.pop %v799
  %v801 = vmul.f32 %v770, 1.442695
  %v802 = vpow.pop %v801
  %v803 = vmul.f32 %v772, 1.442695
  %v804 = vpow.pop %v803
  %v805 = vmul.f32 %v774, 1.442695
  %v806 = vpow.pop %v805
  %v807 = vmul.f32 %v776, 1.442695
  %v808 = vpow.pop %v807
  %v809 = vmul.f32 %v778, 1.442695
  %v810 = vpow.pop %v809
  %v811 = vmul.f32 %v780, 1.442695
  %v812 = vpow.pop %v811
  %813 = vadd.xlane.f32.xlu0 %v782
  %v814 = vpop.xlane.xlu0 %813
  %815 = vadd.xlane.f32.xlu0 %v784
  %v816 = vpop.xlane.xlu0 %815
  %817 = vadd.xlane.f32.xlu0 %v786
  %v818 = vpop.xlane.xlu0 %817
  %819 = vadd.xlane.f32.xlu0 %v788
  %v820 = vpop.xlane.xlu0 %819
  %821 = vadd.xlane.f32.xlu0 %v790
  %v822 = vpop.xlane.xlu0 %821
  %823 = vadd.xlane.f32.xlu0 %v792
  %v824 = vpop.xlane.xlu0 %823
  %825 = vadd.xlane.f32.xlu0 %v794
  %v826 = vpop.xlane.xlu0 %825
  %827 = vadd.xlane.f32.xlu0 %v796
  %v828 = vpop.xlane.xlu0 %827
  %829 = vadd.xlane.f32.xlu0 %v798
  %v830 = vpop.xlane.xlu0 %829
  %831 = vadd.xlane.f32.xlu0 %v800
  %v832 = vpop.xlane.xlu0 %831
  %833 = vadd.xlane.f32.xlu0 %v802
  %v834 = vpop.xlane.xlu0 %833
  %835 = vadd.xlane.f32.xlu0 %v804
  %v836 = vpop.xlane.xlu0 %835
  %837 = vadd.xlane.f32.xlu0 %v806
  %v838 = vpop.xlane.xlu0 %837
  %839 = vadd.xlane.f32.xlu0 %v808
  %v840 = vpop.xlane.xlu0 %839
  %841 = vadd.xlane.f32.xlu0 %v810
  %v842 = vpop.xlane.xlu0 %841
  %843 = vadd.xlane.f32.xlu0 %v812
  %v844 = vpop.xlane.xlu0 %843
  %v845 = vrcp.pop %v814
  %v846 = vrcp.pop %v816
  %v847 = vrcp.pop %v818
  %v848 = vrcp.pop %v820
  %v849 = vrcp.pop %v822
  %v850 = vrcp.pop %v824
  %v851 = vrcp.pop %v826
  %v852 = vrcp.pop %v828
  %v853 = vrcp.pop %v830
  %v854 = vrcp.pop %v832
  %v855 = vrcp.pop %v834
  %v856 = vrcp.pop %v836
  %v857 = vrcp.pop %v838
  %v858 = vrcp.pop %v840
  %v859 = vrcp.pop %v842
  %v860 = vrcp.pop %v844
  %v861 = vmul.f32 %v782, %v845
  %v862 = vmul.f32 %v784, %v846
  %v863 = vmul.f32 %v786, %v847
  %v864 = vmul.f32 %v788, %v848
  %v865 = vmul.f32 %v790, %v849
  %v866 = vmul.f32 %v792, %v850
  %v867 = vmul.f32 %v794, %v851
  %v868 = vmul.f32 %v796, %v852
  %v869 = vmul.f32 %v798, %v853
  %v870 = vmul.f32 %v800, %v854
  %v871 = vmul.f32 %v802, %v855
  %v872 = vmul.f32 %v804, %v856
  %v873 = vmul.f32 %v806, %v857
  %v874 = vmul.f32 %v808, %v858
  %v875 = vmul.f32 %v810, %v859
  %v876 = vmul.f32 %v812, %v860
  %877 = vxpose.xlu0.b32.start [1/16] %v174, 128
  %878 = vxpose.xlu0.b32.cont [2/16] 0.0, 128
  %879 = vxpose.xlu0.b32.cont [3/16] 0.0, 128
  %880 = vxpose.xlu0.b32.cont [4/16] 0.0, 128
  %881 = vxpose.xlu0.b32.cont [5/16] 0.0, 128
  %882 = vxpose.xlu0.b32.cont [6/16] 0.0, 128
  %883 = vxpose.xlu0.b32.cont [7/16] 0.0, 128
  %884 = vxpose.xlu0.b32.cont [8/16] 0.0, 128
  %885 = vxpose.xlu0.b32.cont [9/16] 0.0, 128
  %886 = vxpose.xlu0.b32.cont [10/16] 0.0, 128
  %887 = vxpose.xlu0.b32.cont [11/16] 0.0, 128
  %888 = vxpose.xlu0.b32.cont [12/16] 0.0, 128
  %889 = vxpose.xlu0.b32.cont [13/16] 0.0, 128
  %890 = vxpose.xlu0.b32.cont [14/16] 0.0, 128
  %891 = vxpose.xlu0.b32.cont [15/16] 0.0, 128
  %892 = vxpose.xlu0.b32.end [16/16] 0.0, 128
  %v893 = vpop.trf.xlu0
  %v894 = vpop.trf.xlu0
  %v895 = vpop.trf.xlu0
  %v896 = vpop.trf.xlu0
  %v897 = vpop.trf.xlu0
  %v898 = vpop.trf.xlu0
  %v899 = vpop.trf.xlu0
  %v900 = vpop.trf.xlu0
  %v901 = vpop.trf.xlu0
  %v902 = vpop.trf.xlu0
  %v903 = vpop.trf.xlu0
  %v904 = vpop.trf.xlu0
  %v905 = vpop.trf.xlu0
  %v906 = vpop.trf.xlu0
  %v907 = vpop.trf.xlu0
  %v908 = vpop.trf.xlu0
  %v909 = vpack.c.bf16 %v862, %v861
  %v910 = vpack.c.bf16 %v864, %v863
  %v911 = vpack.c.bf16 %v866, %v865
  %v912 = vpack.c.bf16 %v868, %v867
  %v913 = vpack.c.bf16 %v870, %v869
  %v914 = vpack.c.bf16 %v872, %v871
  %v915 = vpack.c.bf16 %v874, %v873
  %v916 = vpack.c.bf16 %v876, %v875
  %v917 = vpack.c.bf16 %v894, %v893
  %v918 = vpack.c.bf16 %v896, %v895
  %v919 = vpack.c.bf16 %v898, %v897
  %v920 = vpack.c.bf16 %v900, %v899
  %v921 = vpack.c.bf16 %v902, %v901
  %v922 = vpack.c.bf16 %v904, %v903
  %v923 = vpack.c.bf16 %v906, %v905
  %v924 = vpack.c.bf16 %v908, %v907
  %925 = vmatpush.bf16.msra.mxu0 %v924
  %926 = vmatpush.bf16.msra.mxu0 %v923
  %927 = vmatpush.bf16.msra.mxu0 %v922
  %928 = vmatpush.bf16.msra.mxu0 %v921
  %929 = vmatpush.bf16.msra.mxu0 %v920
  %930 = vmatpush.bf16.msra.mxu0 %v919
  %931 = vmatpush.bf16.msra.mxu0 %v918
  %932 = vmatpush.bf16.msra.mxu0 %v917
  %933 = vmatmul.bf16.gmra.mxu0 %v909
  %v934 = vpop.f32.mrf.mxu0
  %v935 = vadd.f32 0.0, %v934
  %v936 = vpop.f32.mrf.mxu0
  %v937 = vadd.f32 0.0, %v936
  %938 = vmatmul.bf16.gmra.mxu0 %v910
  %v939 = vpop.f32.mrf.mxu0
  %v940 = vadd.f32 0.0, %v939
  %v941 = vpop.f32.mrf.mxu0
  %v942 = vadd.f32 0.0, %v941
  %943 = vmatmul.bf16.gmra.mxu0 %v911
  %v944 = vpop.f32.mrf.mxu0
  %v945 = vadd.f32 0.0, %v944
  %v946 = vpop.f32.mrf.mxu0
  %v947 = vadd.f32 0.0, %v946
  %948 = vmatmul.bf16.gmra.mxu0 %v912
  %v949 = vpop.f32.mrf.mxu0
  %v950 = vadd.f32 0.0, %v949
  %v951 = vpop.f32.mrf.mxu0
  %v952 = vadd.f32 0.0, %v951
  %953 = vmatmul.bf16.gmra.mxu0 %v913
  %v954 = vpop.f32.mrf.mxu0
  %v955 = vadd.f32 0.0, %v954
  %v956 = vpop.f32.mrf.mxu0
  %v957 = vadd.f32 0.0, %v956
  %958 = vmatmul.bf16.gmra.mxu0 %v914
  %v959 = vpop.f32.mrf.mxu0
  %v960 = vadd.f32 0.0, %v959
  %v961 = vpop.f32.mrf.mxu0
  %v962 = vadd.f32 0.0, %v961
  %963 = vmatmul.bf16.gmra.mxu0 %v915
  %v964 = vpop.f32.mrf.mxu0
  %v965 = vadd.f32 0.0, %v964
  %v966 = vpop.f32.mrf.mxu0
  %v967 = vadd.f32 0.0, %v966
  %968 = vmatmul.bf16.gmra.mxu0 %v916
  %v969 = vpop.f32.mrf.mxu0
  %v970 = vadd.f32 0.0, %v969
  %v971 = vpop.f32.mrf.mxu0
  %v972 = vadd.f32 0.0, %v971
  %973 = vdwg.mxu0
  %974 = vst.msk [vmem:[%s3 + $0x80] sm:$0xff] %vm86, %v935
  %975 = vst.msk [vmem:[%s3 + $0x88] sm:$0xff] %vm86, %v937
  %976 = vst.msk [vmem:[%s3 + $0x90] sm:$0xff] %vm86, %v940
  %977 = vst.msk [vmem:[%s3 + $0x98] sm:$0xff] %vm86, %v942
  %978 = vst.msk [vmem:[%s3 + $0xa0] sm:$0xff] %vm86, %v945
  %979 = vst.msk [vmem:[%s3 + $0xa8] sm:$0xff] %vm86, %v947
  %980 = vst.msk [vmem:[%s3 + $0xb0] sm:$0xff] %vm86, %v950
  %981 = vst.msk [vmem:[%s3 + $0xb8] sm:$0xff] %vm86, %v952
  %982 = vst.msk [vmem:[%s3 + $0xc0] sm:$0xff] %vm86, %v955
  %983 = vst.msk [vmem:[%s3 + $0xc8] sm:$0xff] %vm86, %v957
  %984 = vst.msk [vmem:[%s3 + $0xd0] sm:$0xff] %vm86, %v960
  %985 = vst.msk [vmem:[%s3 + $0xd8] sm:$0xff] %vm86, %v962
  %986 = vst.msk [vmem:[%s3 + $0xe0] sm:$0xff] %vm86, %v965
  %987 = vst.msk [vmem:[%s3 + $0xe8] sm:$0xff] %vm86, %v967
  %988 = vst.msk [vmem:[%s3 + $0xf0] sm:$0xff] %vm86, %v970
  %989 = vst.msk [vmem:[%s3 + $0xf8] sm:$0xff] %vm86, %v972
  // Predicated region
  $region14: #{self_attention.1} parent=0 // pred_check
    _
  $region15: #{self_attention.1} parent=0 // pred_check_branch
    %991 = sbr.rel (0) target = $region17
  $region16: #{self_attention.1} parent=0 // pred_region
    _
  $region17: #{self_attention.1} parent=0 // pred_fallthru
    _
  // Predicated region
  $region18: #{self_attention.1} parent=0 // pred_check
    _
  $region19: #{self_attention.1} parent=0 // pred_check_branch
    %993 = sbr.rel (0) target = $region21
  $region20: #{self_attention.1} parent=0 // pred_region
    _
  $region21: #{self_attention.1} parent=0 // pred_fallthru
    _

</llo_original>
